<compile_context>
chip_gen: v5e
topology: v5e:2x2
jax: 0.10.0
libtpu: 0.0.40
codegen_flags: <defaults>
</compile_context>

<pallas_src>
import functools

import jax
import jax.numpy as jnp
from jax.experimental import pallas as pl
from jax.experimental.pallas import tpu as pltpu


def _round_up(n, m):
    return ((n + m - 1) // m) * m


def _vmem_capacity_bytes():
    """Physical VMEM of the local chip (v5e/v6e: 128 MiB, v7x: 64 MiB per TC)."""
    try:
        return int(pltpu.get_tpu_info().vmem_capacity_bytes)
    except Exception:
        return 64 * 1024 * 1024  # conservative fallback: v7x per-TensorCore VMEM


def _pick_batch_tile(B, L_p, Cin, Cout, itemsize, budget_bytes):
    """Batch elements folded into one grid step, derived from the VMEM budget.

    Targets up to 1024 matmul rows (TM = Bt * L_p) per step when VMEM allows,
    but always leaves >= 2 grid steps so both v7x TensorCores get work (on
    single-TC v5e/v6e the extra step costs ~0.35 us - negligible).
    """
    per_row = (2 * (Cin + Cout) * itemsize   # double-buffered input/output streams
               + 4 * Cin * itemsize          # xf + rolled/masked tap copies (+ concat)
               + 4 * Cout * 4)               # f32 conv acc / centered / y intermediates
    max_rows = max(8, budget_bytes // max(per_row, 1))
    target_rows = int(min(1024, max_rows))
    bt = max(1, target_rows // max(L_p, 1))
    if B >= 2:
        bt = min(bt, B // 2)                 # keep the grid >= 2 parallel steps (v7x)
    return max(1, min(bt, B))


def _block_kernel(*refs, L, L_p, cg, eps, has_scale_shift, merged_taps, mxu_dtype):
    """One grid step = Bt batch elements, channels-last, true (unpadded) widths.

    x_ref    : (Bt, L_p, Cin)     input rows (L zero-padded to a sublane multiple)
    w_ref    : (3*Cin, Cout)      merged conv taps            [merged_taps=True]
               (3, Cin, Cout)     per-tap conv weights        [merged_taps=False]
    b_ref    : (1, Cout)          conv bias
    g_ref    : (1, Cout)          GroupNorm gamma
    be_ref   : (1, Cout)          GroupNorm beta
    smat_ref : (Cout, G)          one-hot channel -> group sum matrix (f32)
    bmat_ref : (G, Cout)          one-hot group -> channel broadcast matrix (f32)
    sc_ref   : (Bt, 1, Cout)      FiLM scale   [only when has_scale_shift]
    sh_ref   : (Bt, 1, Cout)      FiLM shift   [only when has_scale_shift]
    o_ref    : (Bt, L_p, Cout)    output
    """
    if has_scale_shift:
        (x_ref, w_ref, b_ref, g_ref, be_ref, smat_ref, bmat_ref,
         sc_ref, sh_ref, o_ref) = refs
    else:
        (x_ref, w_ref, b_ref, g_ref, be_ref, smat_ref, bmat_ref, o_ref) = refs
        sc_ref = sh_ref = None

    Bt, _, Cin = x_ref.shape
    Cout = o_ref.shape[2]
    TM = Bt * L_p

    x3 = x_ref[...]
    w = w_ref[...]
    if mxu_dtype is not None:
        x3 = x3.astype(mxu_dtype)
        w = w.astype(mxu_dtype)

    # L_p % 8 == 0 -> merging the leading dims is a pure view (no relayout copy).
    xf = x3.reshape(TM, Cin)

    # per-batch row position, built without an integer modulo
    pos3 = jax.lax.broadcasted_iota(jnp.int32, (Bt, L_p, 1), 1)
    pos = pos3.reshape(TM, 1)

    # --- Conv1d(k=3, pad=1): halo via XLU sublane rolls + boundary masks -------
    x_m1 = jnp.where(pos != 0, pltpu.roll(xf, 1, axis=0), 0.0)           # x[l-1]
    x_p1 = jnp.where(pos != L - 1, pltpu.roll(xf, TM - 1, axis=0), 0.0)  # x[l+1]

    if merged_taps:
        # Cin % 128 == 0: lane-aligned concat, single K=3*Cin matmul fills the
        # 256-deep v6e/v7x MXU and drops two MRF pops + two full-tile f32 adds.
        xcat = jnp.concatenate([x_m1, xf, x_p1], axis=-1)                # (TM, 3*Cin)
        acc = jnp.dot(xcat, w, preferred_element_type=jnp.float32)
    else:
        acc = jnp.dot(x_m1, w[0], preferred_element_type=jnp.float32)
        acc = acc + jnp.dot(xf, w[1], preferred_element_type=jnp.float32)
        acc = acc + jnp.dot(x_p1, w[2], preferred_element_type=jnp.float32)
    acc = acc + b_ref[...].astype(jnp.float32)                           # (TM, Cout)

    # --- GroupNorm: two-pass per-(batch, group) statistics via skinny one-hot
    #     matmuls; padded L rows are masked out of the sums. --------------------
    acc3 = acc.reshape(Bt, L_p, Cout)
    if L_p != L:
        valid = pos3 < L
        acc3 = jnp.where(valid, acc3, 0.0)

    smat = smat_ref[...]                                                  # (Cout, G)
    bmat = bmat_ref[...]                                                  # (G, Cout)
    inv_n = 1.0 / jnp.float32(L * cg)

    ch_sum = jnp.sum(acc3, axis=1)                                        # (Bt, Cout)
    g_mean = jnp.dot(ch_sum, smat, preferred_element_type=jnp.float32) * inv_n
    mean_bc = jnp.dot(g_mean, bmat, preferred_element_type=jnp.float32)  # (Bt, Cout)

    centered = acc3 - mean_bc[:, None, :]
    if L_p != L:
        centered = jnp.where(valid, centered, 0.0)
    ch_sq = jnp.sum(centered * centered, axis=1)                          # (Bt, Cout)
    g_var = jnp.dot(ch_sq, smat, preferred_element_type=jnp.float32) * inv_n
    inv_std = jax.lax.rsqrt(g_var + eps)                                  # (Bt, G)
    inv_bc = jnp.dot(inv_std, bmat, preferred_element_type=jnp.float32)  # (Bt, Cout)

    # --- fold GroupNorm affine + optional FiLM into per-(Bt, Cout) A / C so the
    #     big (Bt, L_p, Cout) tile sees exactly one multiply and one add. -------
    gam = g_ref[...].astype(jnp.float32).reshape(1, 1, Cout)
    bet = be_ref[...].astype(jnp.float32).reshape(1, 1, Cout)
    a_coef = inv_bc[:, None, :] * gam                                     # (Bt, 1, Cout)
    if has_scale_shift:
        s1 = sc_ref[...].astype(jnp.float32) + 1.0                        # (Bt, 1, Cout)
        a_coef = a_coef * s1
        c_coef = bet * s1 + sh_ref[...].astype(jnp.float32)
    else:
        c_coef = bet

    y = centered * a_coef + c_coef
    # SiLU kept exact (EUP exp + full-precision divide) to preserve 1e-4 numerics.
    y = y * jax.nn.sigmoid(y)
    o_ref[...] = y.astype(o_ref.dtype)


def block_forward(x, w, b, gamma, beta, scale_shift=None, *, groups=8, eps=1e-5,
                  mxu_dtype=None):
    """Forward pass of `Block`.

    x: (B, Cin, L) NCL.  w: (Cout, Cin, 3) = nn.Conv1d.weight.  b/gamma/beta: (Cout,).
    scale_shift: optional ((B, Cout, 1), (B, Cout, 1)).  Returns (B, Cout, L).
    """
    B, Cin, L = x.shape
    Cout = w.shape[0]
    assert w.shape == (Cout, Cin, 3), w.shape
    assert Cout % groups == 0
    cg = Cout // groups
    has_ss = scale_shift is not None
    itemsize = jnp.dtype(x.dtype).itemsize

    # --- tiling: VMEM-budget-derived batch fold; batch / L padded as needed ----
    L_p = _round_up(L, 8)                        # sublane-aligned rows -> view reshapes
    vmem_limit = min(3 * _vmem_capacity_bytes() // 4, 96 * 1024 * 1024)
    # grid-invariant operands sit double-buffered in VMEM; budget the tile around them
    param_bytes = 2 * (3 * Cin * Cout * jnp.dtype(w.dtype).itemsize
                       + 3 * Cout * 4 + 2 * Cout * groups * 4)
    budget = max(vmem_limit - param_bytes - (4 << 20), 4 << 20)
    Bt = _pick_batch_tile(B, L_p, Cin, Cout, itemsize, budget)
    B_p = _round_up(B, Bt)
    grid = (B_p // Bt,)

    # --- layout plumbing (no channel padding anywhere) --------------------------
    x_blc = jnp.transpose(x, (0, 2, 1))                                   # (B, L, Cin)
    if B_p != B or L_p != L:
        x_blc = jnp.pad(x_blc, ((0, B_p - B), (0, L_p - L), (0, 0)))

    w_kio = jnp.transpose(w, (2, 1, 0))                                   # (3, Cin, Cout)
    merged = (Cin % 128 == 0)                    # lane-aligned -> fuse taps, K = 3*Cin
    w_kernel = w_kio.reshape(3 * Cin, Cout) if merged else w_kio

    b2 = b.reshape(1, Cout)
    g2 = gamma.reshape(1, Cout)
    be2 = beta.reshape(1, Cout)

    gid = jnp.arange(Cout) // cg
    smat = jax.nn.one_hot(gid, groups, dtype=jnp.float32)                 # (Cout, G)
    bmat = smat.T                                                         # (G, Cout)

    inputs = [x_blc, w_kernel, b2, g2, be2, smat, bmat]
    in_specs = [
        pl.BlockSpec((Bt, L_p, Cin), lambda i: (i, 0, 0)),                # x
        pl.BlockSpec(w_kernel.shape, lambda i: (0,) * w_kernel.ndim),     # conv taps
        pl.BlockSpec((1, Cout), lambda i: (0, 0)),                        # bias
        pl.BlockSpec((1, Cout), lambda i: (0, 0)),                        # gamma
        pl.BlockSpec((1, Cout), lambda i: (0, 0)),                        # beta
        pl.BlockSpec((Cout, groups), lambda i: (0, 0)),                   # group sum
        pl.BlockSpec((groups, Cout), lambda i: (0, 0)),                   # group bcast
    ]
    if has_ss:
        s, sh = scale_shift                                               # (B, Cout, 1)
        scale = jnp.transpose(s, (0, 2, 1))                               # (B, 1, Cout)
        shift = jnp.transpose(sh, (0, 2, 1))
        if B_p != B:
            scale = jnp.pad(scale, ((0, B_p - B), (0, 0), (0, 0)))
            shift = jnp.pad(shift, ((0, B_p - B), (0, 0), (0, 0)))
        inputs += [scale, shift]
        in_specs += [pl.BlockSpec((Bt, 1, Cout), lambda i: (i, 0, 0)),
                     pl.BlockSpec((Bt, 1, Cout), lambda i: (i, 0, 0))]

    kernel = functools.partial(
        _block_kernel, L=L, L_p=L_p, cg=cg, eps=float(eps),
        has_scale_shift=has_ss, merged_taps=merged, mxu_dtype=mxu_dtype)

    out_bytes = B_p * L_p * Cout * itemsize
    ss_bytes = 2 * B_p * Cout * itemsize if has_ss else 0
    cost = pl.CostEstimate(
        flops=int(2 * B_p * L_p * 3 * Cin * Cout + 10 * B_p * L_p * Cout),
        transcendentals=int(B_p * L_p * Cout + B_p * groups),
        bytes_accessed=int(x_blc.size * itemsize
                           + w_kernel.size * jnp.dtype(w.dtype).itemsize
                           + out_bytes + ss_bytes),
    )

    out_blc = pl.pallas_call(
        kernel,
        out_shape=jax.ShapeDtypeStruct((B_p, L_p, Cout), x.dtype),
        grid_spec=pltpu.PrefetchScalarGridSpec(
            num_scalar_prefetch=0,
            grid=grid,
            in_specs=in_specs,
            out_specs=pl.BlockSpec((Bt, L_p, Cout), lambda i: (i, 0, 0)),
        ),
        compiler_params=pltpu.CompilerParams(
            dimension_semantics=("parallel",),
            vmem_limit_bytes=int(vmem_limit),
        ),
        cost_estimate=cost,
    )(*inputs)

    # strip batch / L padding, back to NCL
    return jnp.transpose(out_blc[:B, :L, :], (0, 2, 1))


def _reference_forward(x, w, b, gamma, beta, scale_shift, groups, eps=1e-5):
    """Pure-JAX reference matching the PyTorch module."""
    y = jax.lax.conv_general_dilated(
        x, w, window_strides=(1,), padding=((1, 1),),
        dimension_numbers=("NCH", "OIH", "NCH"),
        precision=jax.lax.Precision.HIGHEST) + b[None, :, None]
    B, C, L = y.shape
    yg = y.reshape(B, groups, C // groups, L)
    mean = yg.mean(axis=(2, 3), keepdims=True)
    var = yg.var(axis=(2, 3), keepdims=True)
    yn = ((yg - mean) / jnp.sqrt(var + eps)).reshape(B, C, L)
    yn = yn * gamma[None, :, None] + beta[None, :, None]
    if scale_shift is not None:
        s, sh = scale_shift
        yn = yn * (s + 1.0) + sh
    return yn * jax.nn.sigmoid(yn)


def _make_params(key, cin, cout):
    k = jax.random.split(key, 4)
    fan_in = cin * 3
    w = jax.random.uniform(k[0], (cout, cin, 3), jnp.float32, -1.0, 1.0) / jnp.sqrt(fan_in)
    b = jax.random.uniform(k[1], (cout,), jnp.float32, -1.0, 1.0) / jnp.sqrt(fan_in)
    gamma = 1.0 + 0.1 * jax.random.normal(k[2], (cout,), jnp.float32)
    beta = 0.1 * jax.random.normal(k[3], (cout,), jnp.float32)
    return w, b, gamma, beta


if __name__ == "__main__":
    key = jax.random.PRNGKey(0)
    k_small, k_ss, k_big = jax.random.split(key, 3)

    # --- case 1 & 2: small channels (unmerged taps), with / without scale_shift
    B, dim, dim_out, L, groups = 2, 16, 32, 16, 8
    ks = jax.random.split(k_small, 2)
    x = jax.random.normal(ks[0], (B, dim, L), jnp.float32)
    w, b, gamma, beta = _make_params(ks[1], dim, dim_out)

    out1 = block_forward(x, w, b, gamma, beta, None, groups=groups)
    jax.block_until_ready(out1)
    ref1 = _reference_forward(x, w, b, gamma, beta, None, groups)
    assert jnp.allclose(out1, ref1, atol=1e-4, rtol=1e-4), "mismatch (no scale_shift)"

    kss = jax.random.split(k_ss, 2)
    scale = 0.2 * jax.random.normal(kss[0], (B, dim_out, 1), jnp.float32)
    shift = 0.2 * jax.random.normal(kss[1], (B, dim_out, 1), jnp.float32)
    out2 = block_forward(x, w, b, gamma, beta, (scale, shift), groups=groups)
    jax.block_until_ready(out2)
    ref2 = _reference_forward(x, w, b, gamma, beta, (scale, shift), groups)
    assert jnp.allclose(out2, ref2, atol=1e-4, rtol=1e-4), "mismatch (with scale_shift)"

    # --- case 3: lane-aligned channels (merged K=3*Cin taps), non-dividing batch
    #     and L not a multiple of 8 (exercises batch/L padding + masking).
    B3, dim3, dim_out3, L3 = 5, 128, 128, 20
    kb = jax.random.split(k_big, 4)
    x3 = jax.random.normal(kb[0], (B3, dim3, L3), jnp.float32)
    w3, b3, gamma3, beta3 = _make_params(kb[1], dim3, dim_out3)
    scale3 = 0.2 * jax.random.normal(kb[2], (B3, dim_out3, 1), jnp.float32)
    shift3 = 0.2 * jax.random.normal(kb[3], (B3, dim_out3, 1), jnp.float32)
    out3 = block_forward(x3, w3, b3, gamma3, beta3, (scale3, shift3), groups=groups)
    jax.block_until_ready(out3)
    ref3 = _reference_forward(x3, w3, b3, gamma3, beta3, (scale3, shift3), groups)
    assert jnp.allclose(out3, ref3, atol=2e-4, rtol=2e-4), "mismatch (merged/padded)"

    print("KERNEL_OK")
</pallas_src>

<mosaic_0001>
module attributes {stable_mosaic.version = 11 : i64} {
  func.func @_block_kernel(%arg0: i32, %arg1: memref<1x16x16xf32, #tpu.memory_space<vmem>>, %arg2: memref<3x16x32xf32, #tpu.memory_space<vmem>>, %arg3: memref<1x32xf32, #tpu.memory_space<vmem>>, %arg4: memref<1x32xf32, #tpu.memory_space<vmem>>, %arg5: memref<1x32xf32, #tpu.memory_space<vmem>>, %arg6: memref<32x8xf32, #tpu.memory_space<vmem>>, %arg7: memref<8x32xf32, #tpu.memory_space<vmem>>, %arg8: memref<1x16x32xf32, #tpu.memory_space<vmem>>) attributes {dimension_semantics = [#tpu.dimension_semantics<parallel>], iteration_bounds = array<i64: 2>, scalar_prefetch = 0 : i64, scratch_operands = 0 : i64, tpu.core_type = #tpu.core_type<tc>, window_params = [{transform_indices = @transform_0, window_bounds = array<i64: 1, 16, 16>}, {pipeline_mode = #tpu.pipeline_mode<synchronous>, transform_indices = @transform_1, window_bounds = array<i64: 3, 16, 32>}, {pipeline_mode = #tpu.pipeline_mode<synchronous>, transform_indices = @transform_2, window_bounds = array<i64: 1, 32>}, {pipeline_mode = #tpu.pipeline_mode<synchronous>, transform_indices = @transform_3, window_bounds = array<i64: 1, 32>}, {pipeline_mode = #tpu.pipeline_mode<synchronous>, transform_indices = @transform_4, window_bounds = array<i64: 1, 32>}, {pipeline_mode = #tpu.pipeline_mode<synchronous>, transform_indices = @transform_5, window_bounds = array<i64: 32, 8>}, {pipeline_mode = #tpu.pipeline_mode<synchronous>, transform_indices = @transform_6, window_bounds = array<i64: 8, 32>}, {transform_indices = @transform_7, window_bounds = array<i64: 1, 16, 32>}]} {
    %c0 = arith.constant 0 : index
    %c0_0 = arith.constant 0 : index
    %c0_1 = arith.constant 0 : index
    %0 = vector.load %arg1[%c0, %c0_0, %c0_1] : memref<1x16x16xf32, #tpu.memory_space<vmem>>, vector<1x16x16xf32>
    %c0_2 = arith.constant 0 : index
    %c0_3 = arith.constant 0 : index
    %c0_4 = arith.constant 0 : index
    %1 = vector.load %arg2[%c0_2, %c0_3, %c0_4] : memref<3x16x32xf32, #tpu.memory_space<vmem>>, vector<3x16x32xf32>
    %2 = vector.shape_cast %0 : vector<1x16x16xf32> to vector<16x16xf32>
    %3 = tpu.iota {dimensions = array<i32: 1>} : vector<1x16x1xi32>
    %4 = vector.shape_cast %3 : vector<1x16x1xi32> to vector<16x1xi32>
    %c0_i32 = arith.constant 0 : i32
    %5 = vector.broadcast %c0_i32 : i32 to vector<16x1xi32>
    %6 = arith.cmpi ne, %4, %5 : vector<16x1xi32>
    %c1_i32 = arith.constant 1 : i32
    %7 = tpu.dynamic_rotate %2 by %c1_i32 dim 0 : vector<16x16xf32>, i32 -> vector<16x16xf32>
    %cst = arith.constant 0.000000e+00 : f32
    %8 = vector.shape_cast %6 : vector<16x1xi1> to vector<16x1xi1>
    %9 = vector.broadcast %8 : vector<16x1xi1> to vector<16x16xi1>
    %10 = vector.broadcast %cst : f32 to vector<16x16xf32>
    %11 = arith.select %9, %7, %10 : vector<16x16xi1>, vector<16x16xf32>
    %c15_i32 = arith.constant 15 : i32
    %12 = vector.broadcast %c15_i32 : i32 to vector<16x1xi32>
    %13 = arith.cmpi ne, %4, %12 : vector<16x1xi32>
    %c15_i32_5 = arith.constant 15 : i32
    %14 = tpu.dynamic_rotate %2 by %c15_i32_5 dim 0 : vector<16x16xf32>, i32 -> vector<16x16xf32>
    %cst_6 = arith.constant 0.000000e+00 : f32
    %15 = vector.shape_cast %13 : vector<16x1xi1> to vector<16x1xi1>
    %16 = vector.broadcast %15 : vector<16x1xi1> to vector<16x16xi1>
    %17 = vector.broadcast %cst_6 : f32 to vector<16x16xf32>
    %18 = arith.select %16, %14, %17 : vector<16x16xi1>, vector<16x16xf32>
    %19 = vector.extract_strided_slice %1 {offsets = [0, 0, 0], sizes = [1, 16, 32], strides = [1, 1, 1]} : vector<3x16x32xf32> to vector<1x16x32xf32>
    %20 = vector.shape_cast %19 : vector<1x16x32xf32> to vector<16x32xf32>
    %cst_7 = arith.constant dense<0.000000e+00> : vector<16x32xf32>
    %21 = tpu.matmul %11, %20, %cst_7 {dimension_numbers = #tpu.dot_dimension_numbers<[1], [0], [0], [1], [0, 0, 1, 1], [], []>} : vector<16x16xf32>, vector<16x32xf32>, vector<16x32xf32> -> vector<16x32xf32>
    %22 = vector.extract_strided_slice %1 {offsets = [1, 0, 0], sizes = [1, 16, 32], strides = [1, 1, 1]} : vector<3x16x32xf32> to vector<1x16x32xf32>
    %23 = vector.shape_cast %22 : vector<1x16x32xf32> to vector<16x32xf32>
    %cst_8 = arith.constant dense<0.000000e+00> : vector<16x32xf32>
    %24 = tpu.matmul %2, %23, %cst_8 {dimension_numbers = #tpu.dot_dimension_numbers<[1], [0], [0], [1], [0, 0, 1, 1], [], []>} : vector<16x16xf32>, vector<16x32xf32>, vector<16x32xf32> -> vector<16x32xf32>
    %25 = arith.addf %21, %24 : vector<16x32xf32>
    %26 = vector.extract_strided_slice %1 {offsets = [2, 0, 0], sizes = [1, 16, 32], strides = [1, 1, 1]} : vector<3x16x32xf32> to vector<1x16x32xf32>
    %27 = vector.shape_cast %26 : vector<1x16x32xf32> to vector<16x32xf32>
    %cst_9 = arith.constant dense<0.000000e+00> : vector<16x32xf32>
    %28 = tpu.matmul %18, %27, %cst_9 {dimension_numbers = #tpu.dot_dimension_numbers<[1], [0], [0], [1], [0, 0, 1, 1], [], []>} : vector<16x16xf32>, vector<16x32xf32>, vector<16x32xf32> -> vector<16x32xf32>
    %29 = arith.addf %25, %28 : vector<16x32xf32>
    %c0_10 = arith.constant 0 : index
    %c0_11 = arith.constant 0 : index
    %30 = vector.load %arg3[%c0_10, %c0_11] : memref<1x32xf32, #tpu.memory_space<vmem>>, vector<1x32xf32>
    %31 = vector.broadcast %30 : vector<1x32xf32> to vector<16x32xf32>
    %32 = arith.addf %29, %31 : vector<16x32xf32>
    %33 = vector.shape_cast %32 : vector<16x32xf32> to vector<1x16x32xf32>
    %c0_12 = arith.constant 0 : index
    %c0_13 = arith.constant 0 : index
    %34 = vector.load %arg6[%c0_12, %c0_13] : memref<32x8xf32, #tpu.memory_space<vmem>>, vector<32x8xf32>
    %c0_14 = arith.constant 0 : index
    %c0_15 = arith.constant 0 : index
    %35 = vector.load %arg7[%c0_14, %c0_15] : memref<8x32xf32, #tpu.memory_space<vmem>>, vector<8x32xf32>
    %cst_16 = arith.constant 1.000000e+00 : f32
    %cst_17 = arith.constant 6.400000e+01 : f32
    %36 = arith.divf %cst_16, %cst_17 : f32
    %cst_18 = arith.constant dense<0.000000e+00> : vector<1x32xf32>
    %37 = vector.multi_reduction <add>, %33, %cst_18 [1] : vector<1x16x32xf32> to vector<1x32xf32>
    %cst_19 = arith.constant dense<0.000000e+00> : vector<1x8xf32>
    %38 = tpu.matmul %37, %34, %cst_19 {dimension_numbers = #tpu.dot_dimension_numbers<[1], [0], [0], [1], [0, 0, 1, 1], [], []>} : vector<1x32xf32>, vector<32x8xf32>, vector<1x8xf32> -> vector<1x8xf32>
    %39 = vector.broadcast %36 : f32 to vector<1x8xf32>
    %40 = arith.mulf %38, %39 : vector<1x8xf32>
    %cst_20 = arith.constant dense<0.000000e+00> : vector<1x32xf32>
    %41 = tpu.matmul %40, %35, %cst_20 {dimension_numbers = #tpu.dot_dimension_numbers<[1], [0], [0], [1], [0, 0, 1, 1], [], []>} : vector<1x8xf32>, vector<8x32xf32>, vector<1x32xf32> -> vector<1x32xf32>
    %42 = vector.shape_cast %41 : vector<1x32xf32> to vector<1x1x32xf32>
    %43 = vector.broadcast %42 : vector<1x1x32xf32> to vector<1x16x32xf32>
    %44 = arith.subf %33, %43 : vector<1x16x32xf32>
    %45 = arith.mulf %44, %44 : vector<1x16x32xf32>
    %cst_21 = arith.constant dense<0.000000e+00> : vector<1x32xf32>
    %46 = vector.multi_reduction <add>, %45, %cst_21 [1] : vector<1x16x32xf32> to vector<1x32xf32>
    %cst_22 = arith.constant dense<0.000000e+00> : vector<1x8xf32>
    %47 = tpu.matmul %46, %34, %cst_22 {dimension_numbers = #tpu.dot_dimension_numbers<[1], [0], [0], [1], [0, 0, 1, 1], [], []>} : vector<1x32xf32>, vector<32x8xf32>, vector<1x8xf32> -> vector<1x8xf32>
    %48 = vector.broadcast %36 : f32 to vector<1x8xf32>
    %49 = arith.mulf %47, %48 : vector<1x8xf32>
    %cst_23 = arith.constant 9.99999974E-6 : f32
    %50 = vector.broadcast %cst_23 : f32 to vector<1x8xf32>
    %51 = arith.addf %49, %50 : vector<1x8xf32>
    %52 = math.rsqrt %51 : vector<1x8xf32>
    %cst_24 = arith.constant dense<0.000000e+00> : vector<1x32xf32>
    %53 = tpu.matmul %52, %35, %cst_24 {dimension_numbers = #tpu.dot_dimension_numbers<[1], [0], [0], [1], [0, 0, 1, 1], [], []>} : vector<1x8xf32>, vector<8x32xf32>, vector<1x32xf32> -> vector<1x32xf32>
    %c0_25 = arith.constant 0 : index
    %c0_26 = arith.constant 0 : index
    %54 = vector.load %arg4[%c0_25, %c0_26] : memref<1x32xf32, #tpu.memory_space<vmem>>, vector<1x32xf32>
    %55 = vector.shape_cast %54 : vector<1x32xf32> to vector<1x1x32xf32>
    %c0_27 = arith.constant 0 : index
    %c0_28 = arith.constant 0 : index
    %56 = vector.load %arg5[%c0_27, %c0_28] : memref<1x32xf32, #tpu.memory_space<vmem>>, vector<1x32xf32>
    %57 = vector.shape_cast %56 : vector<1x32xf32> to vector<1x1x32xf32>
    %58 = vector.shape_cast %53 : vector<1x32xf32> to vector<1x1x32xf32>
    %59 = arith.mulf %58, %55 : vector<1x1x32xf32>
    %60 = vector.broadcast %59 : vector<1x1x32xf32> to vector<1x16x32xf32>
    %61 = arith.mulf %44, %60 : vector<1x16x32xf32>
    %62 = vector.broadcast %57 : vector<1x1x32xf32> to vector<1x16x32xf32>
    %63 = arith.addf %61, %62 : vector<1x16x32xf32>
    %64 = arith.negf %63 : vector<1x16x32xf32>
    %65 = math.exp %64 : vector<1x16x32xf32>
    %cst_29 = arith.constant 1.000000e+00 : f32
    %66 = vector.broadcast %cst_29 : f32 to vector<1x16x32xf32>
    %67 = arith.addf %66, %65 : vector<1x16x32xf32>
    %68 = arith.divf %66, %67 : vector<1x16x32xf32>
    %69 = arith.mulf %63, %68 : vector<1x16x32xf32>
    %c0_30 = arith.constant 0 : index
    %c0_31 = arith.constant 0 : index
    %c0_32 = arith.constant 0 : index
    %70 = vector.load %arg8[%c0_30, %c0_31, %c0_32] : memref<1x16x32xf32, #tpu.memory_space<vmem>>, vector<1x16x32xf32>
    tpu.vector_store %arg8[%c0_30, %c0_31, %c0_32], %69 {strides = array<i32>} : memref<1x16x32xf32, #tpu.memory_space<vmem>>, vector<1x16x32xf32>,
    return
  }
  func.func @transform_0(%arg0: i32) -> (i32, i32, i32) {
    %c0_i32 = arith.constant 0 : i32
    %c0_i32_0 = arith.constant 0 : i32
    %c0_i32_1 = arith.constant 0 : i32
    return %arg0, %c0_i32, %c0_i32_0 : i32, i32, i32
  }
  func.func @transform_1(%arg0: i32) -> (i32, i32, i32) {
    %c0_i32 = arith.constant 0 : i32
    %c0_i32_0 = arith.constant 0 : i32
    %c0_i32_1 = arith.constant 0 : i32
    %c0_i32_2 = arith.constant 0 : i32
    return %c0_i32, %c0_i32_0, %c0_i32_1 : i32, i32, i32
  }
  func.func @transform_2(%arg0: i32) -> (i32, i32) {
    %c0_i32 = arith.constant 0 : i32
    %c0_i32_0 = arith.constant 0 : i32
    %c0_i32_1 = arith.constant 0 : i32
    return %c0_i32, %c0_i32_0 : i32, i32
  }
  func.func @transform_3(%arg0: i32) -> (i32, i32) {
    %c0_i32 = arith.constant 0 : i32
    %c0_i32_0 = arith.constant 0 : i32
    %c0_i32_1 = arith.constant 0 : i32
    return %c0_i32, %c0_i32_0 : i32, i32
  }
  func.func @transform_4(%arg0: i32) -> (i32, i32) {
    %c0_i32 = arith.constant 0 : i32
    %c0_i32_0 = arith.constant 0 : i32
    %c0_i32_1 = arith.constant 0 : i32
    return %c0_i32, %c0_i32_0 : i32, i32
  }
  func.func @transform_5(%arg0: i32) -> (i32, i32) {
    %c0_i32 = arith.constant 0 : i32
    %c0_i32_0 = arith.constant 0 : i32
    %c0_i32_1 = arith.constant 0 : i32
    return %c0_i32, %c0_i32_0 : i32, i32
  }
  func.func @transform_6(%arg0: i32) -> (i32, i32) {
    %c0_i32 = arith.constant 0 : i32
    %c0_i32_0 = arith.constant 0 : i32
    %c0_i32_1 = arith.constant 0 : i32
    return %c0_i32, %c0_i32_0 : i32, i32
  }
  func.func @transform_7(%arg0: i32) -> (i32, i32, i32) {
    %c0_i32 = arith.constant 0 : i32
    %c0_i32_0 = arith.constant 0 : i32
    %c0_i32_1 = arith.constant 0 : i32
    return %arg0, %c0_i32, %c0_i32_0 : i32, i32, i32
  }
}

</mosaic_0001>

<llo_original>
// kernel: tpu_custom_call.1
$region0: #{tpu_custom_call.1}
  #allocation0 [shape = 'u32[]', space=smem, size = 0x4, offset = 0x4, fixed_abs, tag = 'smem constant byte address 0x4 - core index']
  #allocation1 [shape = 'u32[72,128]{1,0:T(1,128)}', space=vmem, size = 0x9000, scoped, tag = 'internal scratch']
  %s0 = inlined_call_operand.vmem [shape: f32[2,16,16], index: 0, kind: input, shape index: {}]
  %s1 = inlined_call_operand.hbm [shape: f32[3,16,32], index: 1, kind: input, shape index: {}]
  %s2 = inlined_call_operand.vmem [shape: f32[1,32], index: 2, kind: input, shape index: {}]
  %s3 = inlined_call_operand.vmem [shape: f32[1,32], index: 3, kind: input, shape index: {}]
  %s4 = inlined_call_operand.vmem [shape: f32[1,32], index: 4, kind: input, shape index: {}]
  %s5 = inlined_call_operand.vmem [shape: f32[32,8], index: 5, kind: input, shape index: {}]
  %s6 = inlined_call_operand.vmem [shape: f32[8,32], index: 6, kind: input, shape index: {}]
  %s7 = inlined_call_operand.hbm [shape: f32[2,16,32], index: 7, kind: output, shape index: {}]
  %s8 = sld [smem:[#allocation0]]
  $region65: #{tpu_custom_call.1} parent=0
    _
  %s10 = ssub.s32 1, %s8
  %s11 = scalar_select 0, %s10, %s8
  $region1: #{tpu_custom_call.1} parent=0
    #allocation2 [shape = 'u8[24576]{0}', space=vmem, size = 0x6000, scoped, tag = 'input window, operand 1, single buffered']
    #allocation3 [shape = 's32[2]{0}', space=sflag, size = 0x8, scoped, tag = 'scoped memory for tpu_custom_call.1']
    #allocation4 [shape = 's32[2]{0}', space=sflag, size = 0x8, scoped, tag = 'scoped memory for tpu_custom_call.1']
    #allocation5 [shape = 'u8[16384]{0}', space=vmem, size = 0x4000, scoped, tag = 'output window, operand 0']
    %12 = vsyncpa [#allocation3], 0
    %13 = vsyncpa [#allocation4], 0
    %s14 = scalar_lea.sflag [#allocation4], 1
    %15 = vsyncpa %s14, 0
    loop: start=0, step=1, limit=4
    $region2: #{tpu_custom_call.1} parent=1 // loop_pre_header
      _
    $region3: #{tpu_custom_call.1} parent=1 // loop_header
      %s17 = sphi 0, %s21
      %p18 = scmp.ge.s32.totalorder %s17, 4
      %s27 = sphi 0, %s29
      %s30 = sphi 0, %s27
      %s31 = sphi 0, %s30
      %s47 = sphi 0, %s31
      %s51 = sphi 0, %s51
      %s53 = sphi 0, %s51
      %s54 = sphi 0, %s53
      %s68 = sphi 0, %s54
      %s72 = sphi 0, %s72
      %s74 = sphi 0, %s72
      %s75 = sphi 0, %s74
      %s89 = sphi 0, %s75
      %s93 = sphi 0, %s93
      %s95 = sphi 0, %s93
      %s96 = sphi 0, %s95
      %s110 = sphi 0, %s96
      %s114 = sphi 0, %s114
      %s116 = sphi 0, %s114
      %s117 = sphi 0, %s116
      %s131 = sphi 0, %s117
      %s135 = sphi 0, %s135
      %s137 = sphi 0, %s135
      %s138 = sphi 0, %s137
      %s152 = sphi 0, %s138
      %s156 = sphi 0, %s156
      %s158 = sphi 0, %s156
      %s159 = sphi 0, %s158
      %s173 = sphi 0, %s159
      %s179 = sphi 0, %s181
      %s182 = sphi 0, %s179
      %s183 = sphi 0, %s182
      %s199 = sphi 0, %s183
    $region4: #{tpu_custom_call.1} parent=1 // loop_header_branch
      %20 = sbr.rel (%p18) target = $region8
    $region5: #{tpu_custom_call.1} parent=1 // loop_body
      %s22 = ssub.s32 %s17, 1
      %s23 = ssub.s32 %s17, 2
      %s24 = sadd.s32 %s17, 1
      %s25 = ssub.s32 %s17, %s24
      %p26 = scmp.eq.s32.totalorder %s25, 0
      %s28 = sadd.s32 %s27, 1
      %s29 = scalar_select %p26, %s27, %s28
      %p32 = pneg %p26
      %p33 = scmp.eq.s32.totalorder %s17, 1
      %p34 = por %p32, %p33
      %p35 = scmp.ne.s32.totalorder %s27, %s30
      %p36 = scmp.eq.s32.totalorder %s17, 0
      %p37 = por %p35, %p36
      %p38 = scmp.ne.s32.totalorder %s27, %s30
      %p39 = scmp.eq.s32.totalorder %s22, 1
      %p40 = por %p38, %p39
      %p41 = scmp.ne.s32.totalorder %s30, %s31
      %p42 = scmp.eq.s32.totalorder %s22, 0
      %p43 = por %p41, %p42
      %p44 = scmp.ne.s32.totalorder %s30, %s31
      %p45 = scmp.eq.s32.totalorder %s23, 1
      %p46 = por %p44, %p45
      %p48 = scmp.ne.s32.totalorder %s31, %s47
      %p49 = scmp.eq.s32.totalorder %s23, 0
      %p50 = por %p48, %p49
      %s52 = sadd.s32 %s51, 1
      %p55 = scmp.eq.s32.totalorder %s17, 1
      %p56 = scmp.ne.s32.totalorder %s51, %s53
      %p57 = scmp.eq.s32.totalorder %s17, 0
      %p58 = por %p56, %p57
      %p59 = scmp.ne.s32.totalorder %s51, %s53
      %p60 = scmp.eq.s32.totalorder %s22, 1
      %p61 = por %p59, %p60
      %p62 = scmp.ne.s32.totalorder %s53, %s54
      %p63 = scmp.eq.s32.totalorder %s22, 0
      %p64 = por %p62, %p63
      %p65 = scmp.ne.s32.totalorder %s53, %s54
      %p66 = scmp.eq.s32.totalorder %s23, 1
      %p67 = por %p65, %p66
      %p69 = scmp.ne.s32.totalorder %s54, %s68
      %p70 = scmp.eq.s32.totalorder %s23, 0
      %p71 = por %p69, %p70
      %s73 = sadd.s32 %s72, 1
      %p76 = scmp.eq.s32.totalorder %s17, 1
      %p77 = scmp.ne.s32.totalorder %s72, %s74
      %p78 = scmp.eq.s32.totalorder %s17, 0
      %p79 = por %p77, %p78
      %p80 = scmp.ne.s32.totalorder %s72, %s74
      %p81 = scmp.eq.s32.totalorder %s22, 1
      %p82 = por %p80, %p81
      %p83 = scmp.ne.s32.totalorder %s74, %s75
      %p84 = scmp.eq.s32.totalorder %s22, 0
      %p85 = por %p83, %p84
      %p86 = scmp.ne.s32.totalorder %s74, %s75
      %p87 = scmp.eq.s32.totalorder %s23, 1
      %p88 = por %p86, %p87
      %p90 = scmp.ne.s32.totalorder %s75, %s89
      %p91 = scmp.eq.s32.totalorder %s23, 0
      %p92 = por %p90, %p91
      %s94 = sadd.s32 %s93, 1
      %p97 = scmp.eq.s32.totalorder %s17, 1
      %p98 = scmp.ne.s32.totalorder %s93, %s95
      %p99 = scmp.eq.s32.totalorder %s17, 0
      %p100 = por %p98, %p99
      %p101 = scmp.ne.s32.totalorder %s93, %s95
      %p102 = scmp.eq.s32.totalorder %s22, 1
      %p103 = por %p101, %p102
      %p104 = scmp.ne.s32.totalorder %s95, %s96
      %p105 = scmp.eq.s32.totalorder %s22, 0
      %p106 = por %p104, %p105
      %p107 = scmp.ne.s32.totalorder %s95, %s96
      %p108 = scmp.eq.s32.totalorder %s23, 1
      %p109 = por %p107, %p108
      %p111 = scmp.ne.s32.totalorder %s96, %s110
      %p112 = scmp.eq.s32.totalorder %s23, 0
      %p113 = por %p111, %p112
      %s115 = sadd.s32 %s114, 1
      %p118 = scmp.eq.s32.totalorder %s17, 1
      %p119 = scmp.ne.s32.totalorder %s114, %s116
      %p120 = scmp.eq.s32.totalorder %s17, 0
      %p121 = por %p119, %p120
      %p122 = scmp.ne.s32.totalorder %s114, %s116
      %p123 = scmp.eq.s32.totalorder %s22, 1
      %p124 = por %p122, %p123
      %p125 = scmp.ne.s32.totalorder %s116, %s117
      %p126 = scmp.eq.s32.totalorder %s22, 0
      %p127 = por %p125, %p126
      %p128 = scmp.ne.s32.totalorder %s116, %s117
      %p129 = scmp.eq.s32.totalorder %s23, 1
      %p130 = por %p128, %p129
      %p132 = scmp.ne.s32.totalorder %s117, %s131
      %p133 = scmp.eq.s32.totalorder %s23, 0
      %p134 = por %p132, %p133
      %s136 = sadd.s32 %s135, 1
      %p139 = scmp.eq.s32.totalorder %s17, 1
      %p140 = scmp.ne.s32.totalorder %s135, %s137
      %p141 = scmp.eq.s32.totalorder %s17, 0
      %p142 = por %p140, %p141
      %p143 = scmp.ne.s32.totalorder %s135, %s137
      %p144 = scmp.eq.s32.totalorder %s22, 1
      %p145 = por %p143, %p144
      %p146 = scmp.ne.s32.totalorder %s137, %s138
      %p147 = scmp.eq.s32.totalorder %s22, 0
      %p148 = por %p146, %p147
      %p149 = scmp.ne.s32.totalorder %s137, %s138
      %p150 = scmp.eq.s32.totalorder %s23, 1
      %p151 = por %p149, %p150
      %p153 = scmp.ne.s32.totalorder %s138, %s152
      %p154 = scmp.eq.s32.totalorder %s23, 0
      %p155 = por %p153, %p154
      %s157 = sadd.s32 %s156, 1
      %p160 = scmp.eq.s32.totalorder %s17, 1
      %p161 = scmp.ne.s32.totalorder %s156, %s158
      %p162 = scmp.eq.s32.totalorder %s17, 0
      %p163 = por %p161, %p162
      %p164 = scmp.ne.s32.totalorder %s156, %s158
      %p165 = scmp.eq.s32.totalorder %s22, 1
      %p166 = por %p164, %p165
      %p167 = scmp.ne.s32.totalorder %s158, %s159
      %p168 = scmp.eq.s32.totalorder %s22, 0
      %p169 = por %p167, %p168
      %p170 = scmp.ne.s32.totalorder %s158, %s159
      %p171 = scmp.eq.s32.totalorder %s23, 1
      %p172 = por %p170, %p171
      %p174 = scmp.ne.s32.totalorder %s159, %s173
      %p175 = scmp.eq.s32.totalorder %s23, 0
      %p176 = por %p174, %p175
      %s177 = ssub.s32 %s17, %s24
      %p178 = scmp.eq.s32.totalorder %s177, 0
      %s180 = sadd.s32 %s179, 1
      %s181 = scalar_select %p178, %s179, %s180
      %p184 = pneg %p178
      %p185 = scmp.eq.s32.totalorder %s17, 1
      %p186 = por %p184, %p185
      %p187 = scmp.ne.s32.totalorder %s179, %s182
      %p188 = scmp.eq.s32.totalorder %s17, 0
      %p189 = por %p187, %p188
      %p190 = scmp.ne.s32.totalorder %s179, %s182
      %p191 = scmp.eq.s32.totalorder %s22, 1
      %p192 = por %p190, %p191
      %p193 = scmp.ne.s32.totalorder %s182, %s183
      %p194 = scmp.eq.s32.totalorder %s22, 0
      %p195 = por %p193, %p194
      %p196 = scmp.ne.s32.totalorder %s182, %s183
      %p197 = scmp.eq.s32.totalorder %s23, 1
      %p198 = por %p196, %p197
      %p200 = scmp.ne.s32.totalorder %s183, %s199
      %p201 = scmp.eq.s32.totalorder %s23, 0
      %p202 = por %p200, %p201
      %p203 = scmp.le.s32.totalorder 1, %s17
      %p204 = scmp.lt.s32.totalorder %s17, 3
      %p205 = pnand %p203, %p204
      %p206 = pneg %p205
      // Predicated region
      $region9: #{tpu_custom_call.1} parent=5 // pred_check
        _
      $region10: #{tpu_custom_call.1} parent=5 // pred_check_branch
        %208 = sbr.rel (%p205) target = $region12
      $region11: #{tpu_custom_call.1} parent=5 // pred_region
        %s209 = ssub.s32 %s17, 1
        // Predicated region
        $region13: #{tpu_custom_call.1} parent=11 // pred_check
          %p210 = pneg %p64
        $region14: #{tpu_custom_call.1} parent=11 // pred_check_branch
          %212 = sbr.rel (%p210) target = $region16
        $region15: #{tpu_custom_call.1} parent=11 // pred_region
          %214 = vsyncadd [#allocation3], 0
          %s215 = sshll.u32 %s1, 4
          %s216 = int_to_ptr.hbm [resolvable:$true] %s215
          %s217 = sshll.u32 [#allocation2], 4
          %s218 = int_to_ptr.vmem [resolvable:$true] %s217
          %223 = dma.hbm_to_vmem [thread:$0]  %s216, 768, %s218, [#allocation3], 128, 128, 8
        $region16: #{tpu_custom_call.1} parent=11 // pred_fallthru
          _
        // Predicated region
        $region17: #{tpu_custom_call.1} parent=11 // pred_check
          %p224 = pneg %p85
        $region18: #{tpu_custom_call.1} parent=11 // pred_check_branch
          %226 = sbr.rel (%p224) target = $region20
        $region19: #{tpu_custom_call.1} parent=11 // pred_region
          _
        $region20: #{tpu_custom_call.1} parent=11 // pred_fallthru
          _
        // Predicated region
        $region21: #{tpu_custom_call.1} parent=11 // pred_check
          %p227 = pneg %p106
        $region22: #{tpu_custom_call.1} parent=11 // pred_check_branch
          %229 = sbr.rel (%p227) target = $region24
        $region23: #{tpu_custom_call.1} parent=11 // pred_region
          _
        $region24: #{tpu_custom_call.1} parent=11 // pred_fallthru
          _
        // Predicated region
        $region25: #{tpu_custom_call.1} parent=11 // pred_check
          %p230 = pneg %p127
        $region26: #{tpu_custom_call.1} parent=11 // pred_check_branch
          %232 = sbr.rel (%p230) target = $region28
        $region27: #{tpu_custom_call.1} parent=11 // pred_region
          _
        $region28: #{tpu_custom_call.1} parent=11 // pred_fallthru
          _
        // Predicated region
        $region29: #{tpu_custom_call.1} parent=11 // pred_check
          %p233 = pneg %p148
        $region30: #{tpu_custom_call.1} parent=11 // pred_check_branch
          %235 = sbr.rel (%p233) target = $region32
        $region31: #{tpu_custom_call.1} parent=11 // pred_region
          _
        $region32: #{tpu_custom_call.1} parent=11 // pred_fallthru
          _
        // Predicated region
        $region33: #{tpu_custom_call.1} parent=11 // pred_check
          %p236 = pneg %p169
        $region34: #{tpu_custom_call.1} parent=11 // pred_check_branch
          %238 = sbr.rel (%p236) target = $region36
        $region35: #{tpu_custom_call.1} parent=11 // pred_region
          _
        $region36: #{tpu_custom_call.1} parent=11 // pred_fallthru
          _
      $region12: #{tpu_custom_call.1} parent=5 // pred_fallthru
        _
      %p239 = scmp.lt.s32.totalorder %s17, 2
      // Predicated region
      $region37: #{tpu_custom_call.1} parent=5 // pred_check
        %p240 = pneg %p239
      $region38: #{tpu_custom_call.1} parent=5 // pred_check_branch
        %242 = sbr.rel (%p240) target = $region40
      $region39: #{tpu_custom_call.1} parent=5 // pred_region
        // Predicated region
        $region41: #{tpu_custom_call.1} parent=39 // pred_check
          %p243 = pneg %p37
        $region42: #{tpu_custom_call.1} parent=39 // pred_check_branch
          %245 = sbr.rel (%p243) target = $region44
        $region43: #{tpu_custom_call.1} parent=39 // pred_region
          %p246 = scmp.lt.s32.totalorder %s17, 1
          %s247 = scalar_select %p246, %s17, 1
          %s248 = smul.addr %s247, 2
          %s249 = smul.addr %s248, 8
          %s250 = scalar_lea.vmem %s0, %s249
        $region44: #{tpu_custom_call.1} parent=39 // pred_fallthru
          _
      $region40: #{tpu_custom_call.1} parent=5 // pred_fallthru
        _
      %p251 = scmp.le.s32.totalorder 1, %s17
      %p252 = scmp.lt.s32.totalorder %s17, 3
      %p253 = pnand %p251, %p252
      %p254 = pneg %p253
      // Predicated region
      $region45: #{tpu_custom_call.1} parent=5 // pred_check
        _
      $region46: #{tpu_custom_call.1} parent=5 // pred_check_branch
        %256 = sbr.rel (%p253) target = $region48
      $region47: #{tpu_custom_call.1} parent=5 // pred_region
        %s257 = ssub.s32 %s17, 1
        // Predicated region
        $region49: #{tpu_custom_call.1} parent=47 // pred_check
          %p258 = pneg %p64
        $region50: #{tpu_custom_call.1} parent=47 // pred_check_branch
          %260 = sbr.rel (%p258) target = $region52
        $region51: #{tpu_custom_call.1} parent=47 // pred_region
          %262 = dma.done [#allocation3], 768
        $region52: #{tpu_custom_call.1} parent=47 // pred_fallthru
          _
        %p263 = scmp.lt.s32.totalorder %s22, 1
        %s264 = scalar_select %p263, %s22, 1
        %s265 = smul.addr %s264, 2
        %s266 = smul.addr %s265, 8
        %s267 = scalar_lea.vmem %s0, %s266
        %p268 = pneg %p43
        %p269 = pneg %p40
        %p270 = pneg %p64
        %p271 = pneg %p61
        %p272 = pneg %p85
        %p273 = pneg %p82
        %p274 = pneg %p106
        %p275 = pneg %p103
        %p276 = pneg %p127
        %p277 = pneg %p124
        %p278 = pneg %p148
        %p279 = pneg %p145
        %p280 = pneg %p169
        %p281 = pneg %p166
        %p282 = pneg %p195
        %p283 = pneg %p192
        %s284 = sand.u32 %s182, 1
        %s285 = scalar_lea.sflag [#allocation4], %s284
        %s286 = sand.u32 %s182, 1
        %s287 = smul.addr %s286, 16
        %s288 = scalar_lea.vmem [#allocation5], %s287
        %p289 = scmp.lt.s32.totalorder %s22, 1
        %s290 = scalar_select %p289, %s22, 1
        %s291 = smul.addr %s290, 2
        %s292 = smul.addr %s291, 8
        %s293 = scalar_lea.vmem %s0, %s292
        %v294 = vld [vmem:[%s293] sm:$0xff]
        %v295 = vld [vmem:[%s293 + $0x8] sm:$0xff]
        %v296 = vld [vmem:[#allocation2] sm:$0xff]
        %v297 = vld [vmem:[#allocation2 + $0x8] sm:$0xff]
        %v298 = vld [vmem:[#allocation2 + $0x10] sm:$0xff]
        %v299 = vld [vmem:[#allocation2 + $0x18] sm:$0xff]
        %v300 = vld [vmem:[#allocation2 + $0x20] sm:$0xff]
        %v301 = vld [vmem:[#allocation2 + $0x28] sm:$0xff]
        %v302 = vlaneseq
        %v303 = vshrl.u32 %v302, 7
        %v304 = vadd.s32 %v303, 8
        %vm305 = vcmp.ne.s32.totalorder %v303, 0
        %vm306 = vcmp.ne.s32.totalorder %v304, 0
        %v307 = vrot.slane %v294, 7
        %v308 = vrot.slane %v295, 7
        %vm309 = vcmp.lt.s32.totalorder %v303, 1
        %v310 = vsel %vm309, %v307, %v308
        %v311 = vsel %vm309, %v308, %v307
        %v312 = vsel %vm305, 1, 0
        %v313 = vsel %vm306, 1, 0
        %vm314 = vcmp.eq.s32.totalorder %v312, 1
        %vm315 = vcmp.eq.s32.totalorder %v313, 1
        %v316 = vsel %vm314, %v311, 0.0
        %v317 = vsel %vm315, %v310, 0.0
        %vm318 = vcmp.ne.s32.totalorder %v303, 15
        %vm319 = vcmp.ne.s32.totalorder %v304, 15
        %v320 = vrot.slane %v294, 1
        %v321 = vrot.slane %v295, 1
        %vm322 = vcmp.lt.s32.totalorder %v303, 7
        %v323 = vsel %vm322, %v320, %v321
        %v324 = vsel %vm322, %v321, %v320
        %v325 = vsel %vm318, 1, 0
        %v326 = vsel %vm319, 1, 0
        %vm327 = vcmp.eq.s32.totalorder %v325, 1
        %vm328 = vcmp.eq.s32.totalorder %v326, 1
        %v329 = vsel %vm327, %v323, 0.0
        %v330 = vsel %vm328, %v324, 0.0
        %vm331 = vcmask 130048
        %v333 = vsel %vm331, %v294, 0
        %v336 = vsel %vm331, %v295, 0
        %338 = vmatpush.msra.mxu0 0.0
        %339 = vmatpush.msra.mxu0 0.0
        %340 = vmatpush.msra.mxu0 0.0
        %341 = vmatpush.msra.mxu0 0.0
        %342 = vmatpush.msra.mxu0 0.0
        %343 = vmatpush.msra.mxu0 0.0
        %344 = vmatpush.msra.mxu0 0.0
        %345 = vmatpush.msra.mxu0 0.0
        %346 = vmatpush.msra.mxu0 0.0
        %347 = vmatpush.msra.mxu0 0.0
        %348 = vmatpush.msra.mxu0 0.0
        %349 = vmatpush.msra.mxu0 0.0
        %350 = vmatpush.msra.mxu0 0.0
        %351 = vmatpush.msra.mxu0 0.0
        %352 = vmatpush.msra.mxu0 %v299
        %353 = vmatpush.msra.mxu0 %v298
        %354 = vmatmul.f32.gmra.mxu0 %v333
        %v355 = vpop.f32.mrf.mxu0
        %v356 = vadd.f32 0.0, %v355
        %357 = vmatmul.f32.gmra.mxu0 %v336
        %v358 = vpop.f32.mrf.mxu0
        %v359 = vadd.f32 0.0, %v358
        %360 = vdwg.mxu0
        %v362 = vsel %vm331, %v316, 0
        %v365 = vsel %vm331, %v317, 0
        %367 = vmatpush.msra.mxu0 0.0
        %368 = vmatpush.msra.mxu0 0.0
        %369 = vmatpush.msra.mxu0 0.0
        %370 = vmatpush.msra.mxu0 0.0
        %371 = vmatpush.msra.mxu0 0.0
        %372 = vmatpush.msra.mxu0 0.0
        %373 = vmatpush.msra.mxu0 0.0
        %374 = vmatpush.msra.mxu0 0.0
        %375 = vmatpush.msra.mxu0 0.0
        %376 = vmatpush.msra.mxu0 0.0
        %377 = vmatpush.msra.mxu0 0.0
        %378 = vmatpush.msra.mxu0 0.0
        %379 = vmatpush.msra.mxu0 0.0
        %380 = vmatpush.msra.mxu0 0.0
        %381 = vmatpush.msra.mxu0 %v297
        %382 = vmatpush.msra.mxu0 %v296
        %383 = vmatmul.f32.gmra.mxu0 %v362
        %v384 = vpop.f32.mrf.mxu0
        %v385 = vadd.f32 %v356, %v384
        %386 = vmatmul.f32.gmra.mxu0 %v365
        %v387 = vpop.f32.mrf.mxu0
        %v388 = vadd.f32 %v359, %v387
        %389 = vdwg.mxu0
        %v391 = vsel %vm331, %v329, 0
        %v394 = vsel %vm331, %v330, 0
        %396 = vmatpush.msra.mxu0 0.0
        %397 = vmatpush.msra.mxu0 0.0
        %398 = vmatpush.msra.mxu0 0.0
        %399 = vmatpush.msra.mxu0 0.0
        %400 = vmatpush.msra.mxu0 0.0
        %401 = vmatpush.msra.mxu0 0.0
        %402 = vmatpush.msra.mxu0 0.0
        %403 = vmatpush.msra.mxu0 0.0
        %404 = vmatpush.msra.mxu0 0.0
        %405 = vmatpush.msra.mxu0 0.0
        %406 = vmatpush.msra.mxu0 0.0
        %407 = vmatpush.msra.mxu0 0.0
        %408 = vmatpush.msra.mxu0 0.0
        %409 = vmatpush.msra.mxu0 0.0
        %410 = vmatpush.msra.mxu0 %v301
        %411 = vmatpush.msra.mxu0 %v300
        %412 = vmatmul.f32.gmra.mxu0 %v391
        %v413 = vpop.f32.mrf.mxu0
        %v414 = vadd.f32 0.0, %v413
        %415 = vmatmul.f32.gmra.mxu0 %v394
        %v416 = vpop.f32.mrf.mxu0
        %v417 = vadd.f32 0.0, %v416
        %418 = vdwg.mxu0
        %v419 = vadd.f32 %v385, %v414
        %v420 = vadd.f32 %v388, %v417
        %v421 = vld [vmem:[%s2] sm:$0x1]
        %v423 = vperm.slane %v421, 0
        %v425 = vadd.f32 %v419, %v423
        %v426 = vadd.f32 %v420, %v423
        %v427 = vld [vmem:[%s5] sm:$0xff]
        %v428 = vld [vmem:[%s5 + $0x8] sm:$0xff]
        %v429 = vld [vmem:[%s5 + $0x10] sm:$0xff]
        %v430 = vld [vmem:[%s5 + $0x18] sm:$0xff]
        %v431 = vld [vmem:[%s6] sm:$0xff]
        %vm432 = vcmask 261120
        %v433 = vsel %vm432, %v425, 0.0
        %v434 = vsel %vm432, %v426, 0.0
        %v435 = vadd.f32 %v433, %v434
        %v436 = vrot.slane %v435, 4
        %v437 = vadd.f32 %v435, %v436
        %v438 = vrot.slane %v437, 2
        %v439 = vadd.f32 %v437, %v438
        %v440 = vrot.slane %v439, 1
        %v441 = vadd.f32 %v439, %v440
        %v443 = vsel %vm432, %v441, 0
        %445 = vmatpush.msra.mxu0 0.0
        %446 = vmatpush.msra.mxu0 0.0
        %447 = vmatpush.msra.mxu0 0.0
        %448 = vmatpush.msra.mxu0 0.0
        %449 = vmatpush.msra.mxu0 0.0
        %450 = vmatpush.msra.mxu0 0.0
        %451 = vmatpush.msra.mxu0 0.0
        %452 = vmatpush.msra.mxu0 0.0
        %453 = vmatpush.msra.mxu0 0.0
        %454 = vmatpush.msra.mxu0 0.0
        %455 = vmatpush.msra.mxu0 0.0
        %456 = vmatpush.msra.mxu0 0.0
        %457 = vmatpush.msra.mxu0 %v430
        %458 = vmatpush.msra.mxu0 %v429
        %459 = vmatpush.msra.mxu0 %v428
        %460 = vmatpush.msra.mxu0 %v427
        %461 = vmatmul.f32.gmra.mxu0 %v443
        %v462 = vpop.f32.mrf.mxu0
        %v463 = vadd.f32 0.0, %v462
        %464 = vdwg.mxu0
        %v465 = vmul.f32 %v463, 0.015625
        %vm466 = vcmask 64512
        %v468 = vsel %vm466, %v465, 0
        %470 = vmatpush.msra.mxu0 0.0
        %471 = vmatpush.msra.mxu0 0.0
        %472 = vmatpush.msra.mxu0 0.0
        %473 = vmatpush.msra.mxu0 0.0
        %474 = vmatpush.msra.mxu0 0.0
        %475 = vmatpush.msra.mxu0 0.0
        %476 = vmatpush.msra.mxu0 0.0
        %477 = vmatpush.msra.mxu0 0.0
        %478 = vmatpush.msra.mxu0 0.0
        %479 = vmatpush.msra.mxu0 0.0
        %480 = vmatpush.msra.mxu0 0.0
        %481 = vmatpush.msra.mxu0 0.0
        %482 = vmatpush.msra.mxu0 0.0
        %483 = vmatpush.msra.mxu0 0.0
        %484 = vmatpush.msra.mxu0 0.0
        %485 = vmatpush.msra.mxu0 %v431
        %486 = vmatmul.f32.gmra.mxu0 %v468
        %v487 = vpop.f32.mrf.mxu0
        %v488 = vadd.f32 0.0, %v487
        %489 = vdwg.mxu0
        %v490 = vperm.slane %v488, 0
        %v491 = vsub.f32 %v425, %v490
        %v492 = vsub.f32 %v426, %v490
        %v493 = vmul.f32 %v491, %v491
        %v494 = vmul.f32 %v492, %v492
        %v495 = vsel %vm432, %v493, 0.0
        %v496 = vsel %vm432, %v494, 0.0
        %v497 = vadd.f32 %v495, %v496
        %v498 = vrot.slane %v497, 4
        %v499 = vadd.f32 %v497, %v498
        %v500 = vrot.slane %v499, 2
        %v501 = vadd.f32 %v499, %v500
        %v502 = vrot.slane %v501, 1
        %v503 = vadd.f32 %v501, %v502
        %v505 = vsel %vm432, %v503, 0
        %507 = vmatpush.msra.mxu0 0.0
        %508 = vmatpush.msra.mxu0 0.0
        %509 = vmatpush.msra.mxu0 0.0
        %510 = vmatpush.msra.mxu0 0.0
        %511 = vmatpush.msra.mxu0 0.0
        %512 = vmatpush.msra.mxu0 0.0
        %513 = vmatpush.msra.mxu0 0.0
        %514 = vmatpush.msra.mxu0 0.0
        %515 = vmatpush.msra.mxu0 0.0
        %516 = vmatpush.msra.mxu0 0.0
        %517 = vmatpush.msra.mxu0 0.0
        %518 = vmatpush.msra.mxu0 0.0
        %519 = vmatpush.msra.mxu0 %v430
        %520 = vmatpush.msra.mxu0 %v429
        %521 = vmatpush.msra.mxu0 %v428
        %522 = vmatpush.msra.mxu0 %v427
        %523 = vmatmul.f32.gmra.mxu0 %v505
        %v524 = vpop.f32.mrf.mxu0
        %v525 = vadd.f32 0.0, %v524
        %526 = vdwg.mxu0
        %v527 = vmul.f32 %v525, 0.015625
        %v528 = vadd.f32 %v527, 1e-05
        %v529 = vrsqrt.pop %v528
        %v530 = vmul.f32 %v529, %v528
        %v531 = vmul.f32 %v530, %v529
        %v532 = vmul.f32 0.5, %v531
        %v533 = vsub.f32 1.5, %v532
        %v534 = vmul.f32 %v529, %v533
        %vm535 = vweird.f32 %v528
        %vm536 = vweird.f32 %v529
        %vm537 = vmor %vm535, %vm536
        %v538 = vsel %vm537, %v529, %v534
        %v540 = vsel %vm466, %v538, 0
        %542 = vmatpush.msra.mxu0 0.0
        %543 = vmatpush.msra.mxu0 0.0
        %544 = vmatpush.msra.mxu0 0.0
        %545 = vmatpush.msra.mxu0 0.0
        %546 = vmatpush.msra.mxu0 0.0
        %547 = vmatpush.msra.mxu0 0.0
        %548 = vmatpush.msra.mxu0 0.0
        %549 = vmatpush.msra.mxu0 0.0
        %550 = vmatpush.msra.mxu0 0.0
        %551 = vmatpush.msra.mxu0 0.0
        %552 = vmatpush.msra.mxu0 0.0
        %553 = vmatpush.msra.mxu0 0.0
        %554 = vmatpush.msra.mxu0 0.0
        %555 = vmatpush.msra.mxu0 0.0
        %556 = vmatpush.msra.mxu0 0.0
        %557 = vmatpush.msra.mxu0 %v431
        %558 = vmatmul.f32.gmra.mxu0 %v540
        %v559 = vpop.f32.mrf.mxu0
        %v560 = vadd.f32 0.0, %v559
        %561 = vdwg.mxu0
        %v562 = vld [vmem:[%s3] sm:$0x1]
        %v563 = vld [vmem:[%s4] sm:$0x1]
        %v564 = vmul.f32 %v560, %v562
        %v565 = vperm.slane %v564, 0
        %v566 = vmul.f32 %v491, %v565
        %v567 = vmul.f32 %v492, %v565
        %v569 = vperm.slane %v563, 0
        %v571 = vadd.f32 %v566, %v569
        %v572 = vadd.f32 %v567, %v569
        %v573 = vxor.u32 %v571, 2147483648
        %v574 = vxor.u32 %v572, 2147483648
        %v575 = vmul.f32 %v573, 1.442695
        %v576 = vpow.pop %v575
        %v577 = vmul.f32 %v574, 1.442695
        %v578 = vpow.pop %v577
        %v579 = vadd.f32 %v576, 1.0
        %v580 = vadd.f32 %v578, 1.0
        %v581 = vrcp.pop %v579
        %v582 = vmul.f32 %v579, %v581
        %v583 = vsub.f32 1.0, %v582
        %v584 = vmul.f32 %v581, %v583
        %v585 = vadd.f32 %v581, %v584
        %vm586 = vweird.f32 %v579
        %vm587 = vweird.f32 %v581
        %vm588 = vmor %vm586, %vm587
        %v589 = vsel %vm588, %v581, %v585
        %v590 = vand.u32 2147483647, %v579
        %vm591 = vcmp.eq.f32.partialorder %v590, 8.507059e+37
        %v592 = vand.u32 %v579, 2147483648
        %v593 = vor.u32 1.1754944e-38, %v592
        %v594 = vsel %vm591, %v593, %v589
        %v595 = vmul.f32 1.0, %v594
        %v596 = vrcp.pop %v580
        %v597 = vmul.f32 %v580, %v596
        %v598 = vsub.f32 1.0, %v597
        %v599 = vmul.f32 %v596, %v598
        %v600 = vadd.f32 %v596, %v599
        %vm601 = vweird.f32 %v580
        %vm602 = vweird.f32 %v596
        %vm603 = vmor %vm601, %vm602
        %v604 = vsel %vm603, %v596, %v600
        %v605 = vand.u32 2147483647, %v580
        %vm606 = vcmp.eq.f32.partialorder %v605, 8.507059e+37
        %v607 = vand.u32 %v580, 2147483648
        %v608 = vor.u32 1.1754944e-38, %v607
        %v609 = vsel %vm606, %v608, %v604
        %v610 = vmul.f32 1.0, %v609
        %v611 = vmul.f32 %v571, %v595
        %v612 = vmul.f32 %v572, %v610
        %613 = vst.msk [vmem:[%s288] sm:$0xff] %vm432, %v611
        %614 = vst.msk [vmem:[%s288 + $0x8] sm:$0xff] %vm432, %v612
        %s615 = sand.u32 %s182, 1
        %s616 = scalar_lea.sflag [#allocation4], %s615
        %s617 = sand.u32 %s182, 1
        %s618 = smul.addr %s617, 16
        %s619 = scalar_lea.vmem [#allocation5], %s618
        // Predicated region
        $region53: #{tpu_custom_call.1} parent=47 // pred_check
          %p620 = pneg %p192
        $region54: #{tpu_custom_call.1} parent=47 // pred_check_branch
          %622 = sbr.rel (%p620) target = $region56
        $region55: #{tpu_custom_call.1} parent=47 // pred_region
          %624 = vsyncadd %s616, 0
          %s625 = smul.addr %s22, 2
          %s626 = smul.addr %s625, 8
          %s627 = scalar_lea.hbm %s7, %s626
          %s628 = sshll.u32 %s619, 4
          %s629 = int_to_ptr.vmem [resolvable:$true] %s628
          %s630 = sshll.u32 %s627, 4
          %s631 = int_to_ptr.hbm [resolvable:$true] %s630
          %636 = dma.vmem_to_hbm [thread:$0]  %s629, 256, %s631, %s616, 128, 128, 8
        $region56: #{tpu_custom_call.1} parent=47 // pred_fallthru
          _
      $region48: #{tpu_custom_call.1} parent=5 // pred_fallthru
        _
      %p637 = scmp.le.s32.totalorder 2, %s17
      // Predicated region
      $region57: #{tpu_custom_call.1} parent=5 // pred_check
        %p638 = pneg %p637
      $region58: #{tpu_custom_call.1} parent=5 // pred_check_branch
        %640 = sbr.rel (%p638) target = $region60
      $region59: #{tpu_custom_call.1} parent=5 // pred_region
        %s641 = ssub.s32 %s17, 2
        // Predicated region
        $region61: #{tpu_custom_call.1} parent=59 // pred_check
          %p642 = pneg %p198
        $region62: #{tpu_custom_call.1} parent=59 // pred_check_branch
          %644 = sbr.rel (%p642) target = $region64
        $region63: #{tpu_custom_call.1} parent=59 // pred_region
          %s645 = sand.u32 %s183, 1
          %s646 = scalar_lea.sflag [#allocation4], %s645
          %s647 = sand.u32 %s183, 1
          %s648 = smul.addr %s647, 16
          %s649 = scalar_lea.vmem [#allocation5], %s648
          %651 = dma.done %s646, 256
        $region64: #{tpu_custom_call.1} parent=59 // pred_fallthru
          _
      $region60: #{tpu_custom_call.1} parent=5 // pred_fallthru
        _
    $region6: #{tpu_custom_call.1} parent=1 // loop_footer
      %s21 = sadd.s32 1, %s17
    $region7: #{tpu_custom_call.1} parent=1 // loop_footer_branch
      %16 = sbr.rel target = $region3
    $region8: #{tpu_custom_call.1} parent=1 // loop_exit
      _
    %652 = vsyncpa [#allocation3], 1
    %s653 = scalar_lea.sflag [#allocation3], 1
    %654 = vsyncpa %s653, 1
    %655 = vsyncpa [#allocation4], 1
    %s656 = scalar_lea.sflag [#allocation4], 1
    %657 = vsyncpa %s656, 1

</llo_original>
